<compile_context>
chip_gen: v7x
topology: tpu7x:2x2x1
jax: 0.10.0
libtpu: 0.0.40
codegen_flags: <defaults>
</compile_context>

<pallas_src>
import functools

import jax
import jax.numpy as jnp
from jax.experimental import pallas as pl
from jax.experimental.pallas import tpu as pltpu


_LANE = 128           # pad the embedding (output) dim to a multiple of this
_MAX_ROW_TILE = 512   # row-tile cap: multiple of 128 (and 8); keeps double-
                      # buffered tiles well inside every generation's scoped VMEM


def _round_up(x, m):
    return (x + m - 1) // m * m


def _pick_row_tile(n_rows):
    """Largest legal row tile: full extent if small, else a multiple of 128."""
    if n_rows <= _MAX_ROW_TILE:
        return n_rows          # block == full array dim is always legal
    return _MAX_ROW_TILE       # multiple of 128 (lane dim) and of 8 (sublane dim)


def _proj_rows_kernel(x_ref, w_ref, b_ref, o_ref, *, compute_dtype):
    """Generic path: one (TM, K) patch-matrix tile @ resident (K, E_pad) weight."""
    acc = jnp.dot(x_ref[...].astype(compute_dtype), w_ref[...],
                  preferred_element_type=jnp.float32)          # (TM, E_pad) f32
    o_ref[...] = (acc + b_ref[...]).astype(o_ref.dtype)


def _proj_chan_major_kernel(x_ref, w_ref, b_ref, o_ref, *, compute_dtype):
    """patch_size == 1 fast path: x tile arrives channel-major (1, C, TP).

    The (C, TP) -> (TP, C) shuffle happens on the small VMEM tile (XLU slot,
    idle in this kernel) instead of as an extra full HBM pass in the wrapper.
    """
    xt = jnp.transpose(x_ref[0], (1, 0))                       # (TP, C) in VMEM
    acc = jnp.dot(xt.astype(compute_dtype), w_ref[...],
                  preferred_element_type=jnp.float32)          # (TP, E_pad) f32
    o_ref[0] = (acc + b_ref[...]).astype(o_ref.dtype)


def patch_embed_1d(x, weight, bias, patch_size, *, compute_dtype=jnp.bfloat16):
    """Forward pass of PatchEmbed1D.

    x:      (B, C, V)
    weight: (E, C, ps)   Conv1d weight layout
    bias:   (E,)
    returns (B, V // ps, E)
    """
    B, C, V = x.shape
    E = weight.shape[0]
    ps = int(patch_size)
    P = V // ps                           # Conv1d drops any tail of V
    K = C * ps
    E_pad = _round_up(E, _LANE)           # lane-dense output columns
    out_dtype = x.dtype

    # Tiny host-side weight/bias prep (K x E elements only; zero-pad columns so
    # the padded results are exactly zero and can be sliced off unchanged).
    w_mat = jnp.transpose(weight.reshape(E, K))                   # (K, E), K = (c, k)
    w_mat = jnp.pad(w_mat, ((0, 0), (0, E_pad - E))).astype(compute_dtype)
    b_mat = jnp.pad(bias.reshape(1, E), ((0, 0), (0, E_pad - E))).astype(jnp.float32)

    flops = 2 * B * P * K * E_pad
    out_bytes = B * P * E_pad * jnp.dtype(out_dtype).itemsize
    w_bytes = w_mat.size * w_mat.dtype.itemsize + b_mat.size * b_mat.dtype.itemsize

    if ps == 1:
        # ---- fused path: read x in native (B, C, V) layout, no host transpose.
        TP = _pick_row_tile(P)
        cost = pl.CostEstimate(
            flops=flops, transcendentals=0,
            bytes_accessed=x.size * x.dtype.itemsize + w_bytes + out_bytes)
        kern = functools.partial(_proj_chan_major_kernel, compute_dtype=compute_dtype)
        y_pad = pl.pallas_call(
            kern,
            out_shape=jax.ShapeDtypeStruct((B, P, E_pad), out_dtype),
            grid=(B, pl.cdiv(P, TP)),
            in_specs=[
                pl.BlockSpec((1, C, TP), lambda b, j: (b, 0, j)),
                pl.BlockSpec((C, E_pad), lambda b, j: (0, 0)),    # resident weight
                pl.BlockSpec((1, E_pad), lambda b, j: (0, 0)),    # resident bias
            ],
            out_specs=pl.BlockSpec((1, TP, E_pad), lambda b, j: (b, j, 0)),
            compiler_params=pltpu.CompilerParams(
                dimension_semantics=("parallel", "parallel")),
            cost_estimate=cost,
        )(x, w_mat, b_mat)
    else:
        # TODO(synk): for patch_size > 1 the (C, ps) patch interleave is still a
        # single host-side XLA reshape/transpose of x; fusing it would need an
        # in-VMEM (C, TP, ps) -> (TP, C*ps) relayout inside the kernel.
        x_p = (x[:, :, :P * ps]
               .reshape(B, C, P, ps)
               .transpose(0, 2, 1, 3)
               .reshape(B * P, K))
        M = B * P
        TM = _pick_row_tile(M)
        cost = pl.CostEstimate(
            flops=flops, transcendentals=0,
            bytes_accessed=x_p.size * x_p.dtype.itemsize + w_bytes + out_bytes)
        kern = functools.partial(_proj_rows_kernel, compute_dtype=compute_dtype)
        y_pad = pl.pallas_call(
            kern,
            out_shape=jax.ShapeDtypeStruct((M, E_pad), out_dtype),
            grid=(pl.cdiv(M, TM),),
            in_specs=[
                pl.BlockSpec((TM, K), lambda i: (i, 0)),
                pl.BlockSpec((K, E_pad), lambda i: (0, 0)),       # resident weight
                pl.BlockSpec((1, E_pad), lambda i: (0, 0)),       # resident bias
            ],
            out_specs=pl.BlockSpec((TM, E_pad), lambda i: (i, 0)),
            compiler_params=pltpu.CompilerParams(
                dimension_semantics=("parallel",)),
            cost_estimate=cost,
        )(x_p, w_mat, b_mat)
        y_pad = y_pad.reshape(B, P, E_pad)

    return y_pad[..., :E] if E_pad != E else y_pad


def _reference(x, weight, bias, patch_size):
    """Pure-JAX reference matching nn.Conv1d(kernel=stride=ps) + transpose(1,2)."""
    B, C, V = x.shape
    ps = patch_size
    P = V // ps
    xp = x[:, :, :P * ps].reshape(B, C, P, ps)
    return jnp.einsum("bcpk,eck->bpe", xp, weight) + bias[None, None, :]


if __name__ == "__main__":
    key = jax.random.PRNGKey(0)

    def run_case(B, C, V, ps, E, k):
        kx, kw, kb = jax.random.split(k, 3)
        x = jax.random.normal(kx, (B, C, V), dtype=jnp.float32)
        w = jax.random.normal(kw, (E, C, ps), dtype=jnp.float32) * 0.05
        b = jax.random.normal(kb, (E,), dtype=jnp.float32) * 0.01
        y = jax.block_until_ready(patch_embed_1d(x, w, b, ps))
        y_ref = _reference(x, w, b, ps)
        assert y.shape == (B, V // ps, E), y.shape
        err = float(jnp.max(jnp.abs(y - y_ref)))
        # bf16 MXU operands, f32 accumulation -> loosened tolerance vs pure f32.
        assert jnp.allclose(y, y_ref, atol=2e-2, rtol=2e-2), err

    k1, k2 = jax.random.split(key)
    # Module-default-like config (patch_size=1): fused, no-host-transpose path.
    run_case(B=2, C=8, V=16, ps=1, E=32, k=k1)
    # patch_size=2 config: tiled patch-matrix path.
    run_case(B=2, C=8, V=16, ps=2, E=32, k=k2)

    print("KERNEL_OK")
</pallas_src>

<mosaic_0001>
module attributes {stable_mosaic.version = 11 : i64} {
  func.func @_proj_chan_major_kernel(%arg0: i32, %arg1: i32, %arg2: memref<1x8x16xf32, #tpu.memory_space<vmem>>, %arg3: memref<8x128xbf16, #tpu.memory_space<vmem>>, %arg4: memref<1x128xf32, #tpu.memory_space<vmem>>, %arg5: memref<1x16x128xf32, #tpu.memory_space<vmem>>) attributes {dimension_semantics = [#tpu.dimension_semantics<parallel>, #tpu.dimension_semantics<parallel>], iteration_bounds = array<i64: 2, 1>, scalar_prefetch = 0 : i64, scratch_operands = 0 : i64, tpu.core_type = #tpu.core_type<tc>, window_params = [{transform_indices = @transform_0, window_bounds = array<i64: 1, 8, 16>}, {pipeline_mode = #tpu.pipeline_mode<synchronous>, transform_indices = @transform_1, window_bounds = array<i64: 8, 128>}, {pipeline_mode = #tpu.pipeline_mode<synchronous>, transform_indices = @transform_2, window_bounds = array<i64: 1, 128>}, {transform_indices = @transform_3, window_bounds = array<i64: 1, 16, 128>}]} {
    %c0 = arith.constant 0 : index
    %c0_0 = arith.constant 0 : index
    %c0_1 = arith.constant 0 : index
    %0 = vector.load %arg2[%c0, %c0_0, %c0_1] : memref<1x8x16xf32, #tpu.memory_space<vmem>>, vector<1x8x16xf32>
    %1 = vector.shape_cast %0 : vector<1x8x16xf32> to vector<8x16xf32>
    %2 = tpu.transpose %1, [1, 0] : vector<8x16xf32> -> vector<16x8xf32>
    %3 = arith.truncf %2 : vector<16x8xf32> to vector<16x8xbf16>
    %c0_2 = arith.constant 0 : index
    %c0_3 = arith.constant 0 : index
    %4 = vector.load %arg3[%c0_2, %c0_3] : memref<8x128xbf16, #tpu.memory_space<vmem>>, vector<8x128xbf16>
    %cst = arith.constant dense<0.000000e+00> : vector<16x128xf32>
    %5 = tpu.matmul %3, %4, %cst {dimension_numbers = #tpu.dot_dimension_numbers<[1], [0], [0], [1], [0, 0, 1, 1], [], []>} : vector<16x8xbf16>, vector<8x128xbf16>, vector<16x128xf32> -> vector<16x128xf32>
    %c0_4 = arith.constant 0 : index
    %c0_5 = arith.constant 0 : index
    %6 = vector.load %arg4[%c0_4, %c0_5] : memref<1x128xf32, #tpu.memory_space<vmem>>, vector<1x128xf32>
    %7 = vector.broadcast %6 : vector<1x128xf32> to vector<16x128xf32>
    %8 = arith.addf %5, %7 : vector<16x128xf32>
    %c0_6 = arith.constant 0 : index
    %c0_7 = arith.constant 0 : index
    %c0_8 = arith.constant 0 : index
    %9 = vector.load %arg5[%c0_6, %c0_7, %c0_8] : memref<1x16x128xf32, #tpu.memory_space<vmem>>, vector<1x16x128xf32>
    %10 = vector.shape_cast %9 : vector<1x16x128xf32> to vector<16x128xf32>
    %11 = vector.shape_cast %8 : vector<16x128xf32> to vector<1x16x128xf32>
    tpu.vector_store %arg5[%c0_6, %c0_7, %c0_8], %11 {strides = array<i32>} : memref<1x16x128xf32, #tpu.memory_space<vmem>>, vector<1x16x128xf32>,
    return
  }
  func.func @transform_0(%arg0: i32, %arg1: i32) -> (i32, i32, i32) {
    %c0_i32 = arith.constant 0 : i32
    %c0_i32_0 = arith.constant 0 : i32
    return %arg0, %c0_i32, %arg1 : i32, i32, i32
  }
  func.func @transform_1(%arg0: i32, %arg1: i32) -> (i32, i32) {
    %c0_i32 = arith.constant 0 : i32
    %c0_i32_0 = arith.constant 0 : i32
    %c0_i32_1 = arith.constant 0 : i32
    return %c0_i32, %c0_i32_0 : i32, i32
  }
  func.func @transform_2(%arg0: i32, %arg1: i32) -> (i32, i32) {
    %c0_i32 = arith.constant 0 : i32
    %c0_i32_0 = arith.constant 0 : i32
    %c0_i32_1 = arith.constant 0 : i32
    return %c0_i32, %c0_i32_0 : i32, i32
  }
  func.func @transform_3(%arg0: i32, %arg1: i32) -> (i32, i32, i32) {
    %c0_i32 = arith.constant 0 : i32
    %c0_i32_0 = arith.constant 0 : i32
    return %arg0, %arg1, %c0_i32 : i32, i32, i32
  }
}

</mosaic_0001>

<llo_original>
// kernel: tpu_custom_call.1
$region0: #{tpu_custom_call.1}
  #allocation0 [shape = 'u32[]', space=smem, size = 0x4, offset = 0x4, fixed_abs, tag = 'smem constant byte address 0x4 - core index']
  #allocation1 [shape = 'u32[144,128]{1,0:T(1,128)}', space=vmem, size = 0x12000, scoped, tag = 'internal scratch']
  %s0 = inlined_call_operand.hbm [shape: f32[2,8,16], index: 0, kind: input, shape index: {}]
  %s1 = inlined_call_operand.hbm [shape: bf16[8,128], index: 1, kind: input, shape index: {}]
  %s2 = inlined_call_operand.vmem [shape: f32[1,128], index: 2, kind: input, shape index: {}]
  %s3 = inlined_call_operand.hbm [shape: f32[2,16,128], index: 3, kind: output, shape index: {}]
  %s4 = sld [smem:[#allocation0]]
  $region53: #{tpu_custom_call.1} parent=0
    _
  %s6 = ssub.s32 1, %s4
  %s7 = scalar_select 0, %s6, %s4
  $region1: #{tpu_custom_call.1} parent=0
    #allocation2 [shape = 'u8[8192]{0}', space=vmem, size = 0x2000, scoped, tag = 'input window, operand 0']
    #allocation3 [shape = 's32[2]{0}', space=sflag, size = 0x8, scoped, tag = 'scoped memory for tpu_custom_call.1']
    #allocation4 [shape = 's32[2]{0}', space=sflag, size = 0x8, scoped, tag = 'scoped memory for tpu_custom_call.1']
    #allocation5 [shape = 'u8[2048]{0}', space=vmem, size = 0x800, scoped, tag = 'input window, operand 1, single buffered']
    #allocation6 [shape = 's32[1]{0}', space=sflag, size = 0x4, scoped, tag = 'scoped memory for tpu_custom_call.1']
    #allocation7 [shape = 'u8[16384]{0}', space=vmem, size = 0x4000, scoped, tag = 'output window, operand 0']
    %8 = vsyncpa [#allocation3], 0
    %s9 = scalar_lea.sflag [#allocation3], 1
    %10 = vsyncpa %s9, 0
    %11 = vsyncpa [#allocation6], 0
    %12 = vsyncpa [#allocation4], 0
    %s13 = scalar_lea.sflag [#allocation4], 1
    %14 = vsyncpa %s13, 0
    loop: start=0, step=1, limit=4
    $region2: #{tpu_custom_call.1} parent=1 // loop_pre_header
      _
    $region3: #{tpu_custom_call.1} parent=1 // loop_header
      %s16 = sphi 0, %s20
      %p17 = scmp.ge.s32.totalorder %s16, 4
      %s23 = sphi 0, %s35
      %s24 = sphi 0, %s31
      %s25 = sphi 0, %s23
      %s26 = sphi 0, %s24
      %s27 = sphi 0, %s25
      %s28 = sphi 0, %s26
      %s40 = sphi 0, %s42
      %s43 = sphi 0, %s40
      %s44 = sphi 0, %s43
      %s60 = sphi 0, %s44
      %s64 = sphi 0, %s64
      %s66 = sphi 0, %s64
      %s67 = sphi 0, %s66
      %s81 = sphi 0, %s67
      %s85 = sphi 0, %s85
      %s87 = sphi 0, %s85
      %s88 = sphi 0, %s87
      %s102 = sphi 0, %s88
      %s110 = sphi 0, %s112
      %s113 = sphi 0, %s110
      %s114 = sphi 0, %s113
      %s130 = sphi 0, %s114
    $region4: #{tpu_custom_call.1} parent=1 // loop_header_branch
      %19 = sbr.rel (%p17) target = $region8
    $region5: #{tpu_custom_call.1} parent=1 // loop_body
      %s21 = ssub.s32 %s16, 1
      %s22 = ssub.s32 %s16, 2
      %s29 = sadd.s32 1, %s24
      %p30 = scmp.ge.s32.totalorder %s29, 1
      %s31 = scalar_select %p30, 0, %s29
      %s32 = sadd.s32 1, %s23
      %s33 = scalar_select %p30, %s32, %s23
      %p34 = scmp.ge.s32.totalorder %s33, 2
      %s35 = scalar_select %p34, 0, %s33
      %s36 = ssub.s32 %s23, %s35
      %s37 = ssub.s32 %s24, %s31
      %s38 = sor.u32 %s36, %s37
      %p39 = scmp.eq.s32.totalorder %s38, 0
      %s41 = sadd.s32 %s40, 1
      %s42 = scalar_select %p39, %s40, %s41
      %p45 = pneg %p39
      %p46 = scmp.eq.s32.totalorder %s16, 1
      %p47 = por %p45, %p46
      %p48 = scmp.ne.s32.totalorder %s40, %s43
      %p49 = scmp.eq.s32.totalorder %s16, 0
      %p50 = por %p48, %p49
      %p51 = scmp.ne.s32.totalorder %s40, %s43
      %p52 = scmp.eq.s32.totalorder %s21, 1
      %p53 = por %p51, %p52
      %p54 = scmp.ne.s32.totalorder %s43, %s44
      %p55 = scmp.eq.s32.totalorder %s21, 0
      %p56 = por %p54, %p55
      %p57 = scmp.ne.s32.totalorder %s43, %s44
      %p58 = scmp.eq.s32.totalorder %s22, 1
      %p59 = por %p57, %p58
      %p61 = scmp.ne.s32.totalorder %s44, %s60
      %p62 = scmp.eq.s32.totalorder %s22, 0
      %p63 = por %p61, %p62
      %s65 = sadd.s32 %s64, 1
      %p68 = scmp.eq.s32.totalorder %s16, 1
      %p69 = scmp.ne.s32.totalorder %s64, %s66
      %p70 = scmp.eq.s32.totalorder %s16, 0
      %p71 = por %p69, %p70
      %p72 = scmp.ne.s32.totalorder %s64, %s66
      %p73 = scmp.eq.s32.totalorder %s21, 1
      %p74 = por %p72, %p73
      %p75 = scmp.ne.s32.totalorder %s66, %s67
      %p76 = scmp.eq.s32.totalorder %s21, 0
      %p77 = por %p75, %p76
      %p78 = scmp.ne.s32.totalorder %s66, %s67
      %p79 = scmp.eq.s32.totalorder %s22, 1
      %p80 = por %p78, %p79
      %p82 = scmp.ne.s32.totalorder %s67, %s81
      %p83 = scmp.eq.s32.totalorder %s22, 0
      %p84 = por %p82, %p83
      %s86 = sadd.s32 %s85, 1
      %p89 = scmp.eq.s32.totalorder %s16, 1
      %p90 = scmp.ne.s32.totalorder %s85, %s87
      %p91 = scmp.eq.s32.totalorder %s16, 0
      %p92 = por %p90, %p91
      %p93 = scmp.ne.s32.totalorder %s85, %s87
      %p94 = scmp.eq.s32.totalorder %s21, 1
      %p95 = por %p93, %p94
      %p96 = scmp.ne.s32.totalorder %s87, %s88
      %p97 = scmp.eq.s32.totalorder %s21, 0
      %p98 = por %p96, %p97
      %p99 = scmp.ne.s32.totalorder %s87, %s88
      %p100 = scmp.eq.s32.totalorder %s22, 1
      %p101 = por %p99, %p100
      %p103 = scmp.ne.s32.totalorder %s88, %s102
      %p104 = scmp.eq.s32.totalorder %s22, 0
      %p105 = por %p103, %p104
      %s106 = ssub.s32 %s23, %s35
      %s107 = ssub.s32 %s24, %s31
      %s108 = sor.u32 %s106, %s107
      %p109 = scmp.eq.s32.totalorder %s108, 0
      %s111 = sadd.s32 %s110, 1
      %s112 = scalar_select %p109, %s110, %s111
      %p115 = pneg %p109
      %p116 = scmp.eq.s32.totalorder %s16, 1
      %p117 = por %p115, %p116
      %p118 = scmp.ne.s32.totalorder %s110, %s113
      %p119 = scmp.eq.s32.totalorder %s16, 0
      %p120 = por %p118, %p119
      %p121 = scmp.ne.s32.totalorder %s110, %s113
      %p122 = scmp.eq.s32.totalorder %s21, 1
      %p123 = por %p121, %p122
      %p124 = scmp.ne.s32.totalorder %s113, %s114
      %p125 = scmp.eq.s32.totalorder %s21, 0
      %p126 = por %p124, %p125
      %p127 = scmp.ne.s32.totalorder %s113, %s114
      %p128 = scmp.eq.s32.totalorder %s22, 1
      %p129 = por %p127, %p128
      %p131 = scmp.ne.s32.totalorder %s114, %s130
      %p132 = scmp.eq.s32.totalorder %s22, 0
      %p133 = por %p131, %p132
      %p134 = scmp.le.s32.totalorder 1, %s16
      %p135 = scmp.lt.s32.totalorder %s16, 3
      %p136 = pnand %p134, %p135
      %p137 = pneg %p136
      // Predicated region
      $region9: #{tpu_custom_call.1} parent=5 // pred_check
        _
      $region10: #{tpu_custom_call.1} parent=5 // pred_check_branch
        %139 = sbr.rel (%p136) target = $region12
      $region11: #{tpu_custom_call.1} parent=5 // pred_region
        %s140 = ssub.s32 %s16, 1
        // Predicated region
        $region13: #{tpu_custom_call.1} parent=11 // pred_check
          %p141 = pneg %p77
        $region14: #{tpu_custom_call.1} parent=11 // pred_check_branch
          %143 = sbr.rel (%p141) target = $region16
        $region15: #{tpu_custom_call.1} parent=11 // pred_region
          %s145 = ssub.s32 64, 64
          %146 = vsyncadd [#allocation6], %s145
          %s148 = sshll.u32 [#allocation5], 4
          %s149 = int_to_ptr.vmem [resolvable:$true] %s148
          %151 = dma.hbm_to_vmem [thread:$0]  %s1, 64, %s149, [#allocation6]
        $region16: #{tpu_custom_call.1} parent=11 // pred_fallthru
          _
        // Predicated region
        $region17: #{tpu_custom_call.1} parent=11 // pred_check
          %p152 = pneg %p98
        $region18: #{tpu_custom_call.1} parent=11 // pred_check_branch
          %154 = sbr.rel (%p152) target = $region20
        $region19: #{tpu_custom_call.1} parent=11 // pred_region
          _
        $region20: #{tpu_custom_call.1} parent=11 // pred_fallthru
          _
      $region12: #{tpu_custom_call.1} parent=5 // pred_fallthru
        _
      %p155 = scmp.lt.s32.totalorder %s16, 2
      // Predicated region
      $region21: #{tpu_custom_call.1} parent=5 // pred_check
        %p156 = pneg %p155
      $region22: #{tpu_custom_call.1} parent=5 // pred_check_branch
        %158 = sbr.rel (%p156) target = $region24
      $region23: #{tpu_custom_call.1} parent=5 // pred_region
        // Predicated region
        $region25: #{tpu_custom_call.1} parent=23 // pred_check
          %p159 = pneg %p50
        $region26: #{tpu_custom_call.1} parent=23 // pred_check_branch
          %161 = sbr.rel (%p159) target = $region28
        $region27: #{tpu_custom_call.1} parent=23 // pred_region
          %s162 = sand.u32 %s40, 1
          %s163 = scalar_lea.sflag [#allocation3], %s162
          %s164 = sand.u32 %s40, 1
          %s165 = smul.addr %s164, 8
          %s166 = scalar_lea.vmem [#allocation2], %s165
          %s168 = ssub.s32 128, 128
          %169 = vsyncadd %s163, %s168
          %s170 = sadd.s32 %s24, %s23
          %s171 = smul.addr %s170, 128
          %s172 = scalar_lea.hbm %s0, %s171
          %s174 = sshll.u32 %s166, 4
          %s175 = int_to_ptr.vmem [resolvable:$true] %s174
          %177 = dma.hbm_to_vmem [thread:$0]  %s172, 128, %s175, %s163
        $region28: #{tpu_custom_call.1} parent=23 // pred_fallthru
          _
      $region24: #{tpu_custom_call.1} parent=5 // pred_fallthru
        _
      %p178 = scmp.le.s32.totalorder 1, %s16
      %p179 = scmp.lt.s32.totalorder %s16, 3
      %p180 = pnand %p178, %p179
      %p181 = pneg %p180
      // Predicated region
      $region29: #{tpu_custom_call.1} parent=5 // pred_check
        _
      $region30: #{tpu_custom_call.1} parent=5 // pred_check_branch
        %183 = sbr.rel (%p180) target = $region32
      $region31: #{tpu_custom_call.1} parent=5 // pred_region
        %s184 = ssub.s32 %s16, 1
        %s185 = sand.u32 %s43, 1
        %s186 = scalar_lea.sflag [#allocation3], %s185
        %s187 = sand.u32 %s43, 1
        %s188 = smul.addr %s187, 8
        %s189 = scalar_lea.vmem [#allocation2], %s188
        // Predicated region
        $region33: #{tpu_custom_call.1} parent=31 // pred_check
          %p190 = pneg %p56
        $region34: #{tpu_custom_call.1} parent=31 // pred_check_branch
          %192 = sbr.rel (%p190) target = $region36
        $region35: #{tpu_custom_call.1} parent=31 // pred_region
          %193 = dma.done %s186, 128
        $region36: #{tpu_custom_call.1} parent=31 // pred_fallthru
          _
        // Predicated region
        $region37: #{tpu_custom_call.1} parent=31 // pred_check
          %p194 = pneg %p77
        $region38: #{tpu_custom_call.1} parent=31 // pred_check_branch
          %196 = sbr.rel (%p194) target = $region40
        $region39: #{tpu_custom_call.1} parent=31 // pred_region
          %197 = dma.done [#allocation6], 64
        $region40: #{tpu_custom_call.1} parent=31 // pred_fallthru
          _
        %s198 = sand.u32 %s43, 1
        %s199 = scalar_lea.sflag [#allocation3], %s198
        %s200 = sand.u32 %s43, 1
        %s201 = smul.addr %s200, 8
        %s202 = scalar_lea.vmem [#allocation2], %s201
        %p203 = pneg %p56
        %p204 = pneg %p53
        %p205 = pneg %p77
        %p206 = pneg %p74
        %p207 = pneg %p98
        %p208 = pneg %p95
        %p209 = pneg %p126
        %p210 = pneg %p123
        %s211 = sand.u32 %s113, 1
        %s212 = scalar_lea.sflag [#allocation4], %s211
        %s213 = sand.u32 %s113, 1
        %s214 = smul.addr %s213, 16
        %s215 = scalar_lea.vmem [#allocation7], %s214
        %s216 = smul.u32 2, %s26
        %v218 = vld [vmem:[%s189] sm:$0xff]
        %219 = vxpose.xlu0.b32.start [1/16] %v218, 128
        %220 = vxpose.xlu0.b32.cont [2/16] 0.0, 128
        %221 = vxpose.xlu0.b32.cont [3/16] 0.0, 128
        %222 = vxpose.xlu0.b32.cont [4/16] 0.0, 128
        %223 = vxpose.xlu0.b32.cont [5/16] 0.0, 128
        %224 = vxpose.xlu0.b32.cont [6/16] 0.0, 128
        %225 = vxpose.xlu0.b32.cont [7/16] 0.0, 128
        %226 = vxpose.xlu0.b32.cont [8/16] 0.0, 128
        %227 = vxpose.xlu0.b32.cont [9/16] 0.0, 128
        %228 = vxpose.xlu0.b32.cont [10/16] 0.0, 128
        %229 = vxpose.xlu0.b32.cont [11/16] 0.0, 128
        %230 = vxpose.xlu0.b32.cont [12/16] 0.0, 128
        %231 = vxpose.xlu0.b32.cont [13/16] 0.0, 128
        %232 = vxpose.xlu0.b32.cont [14/16] 0.0, 128
        %233 = vxpose.xlu0.b32.cont [15/16] 0.0, 128
        %234 = vxpose.xlu0.b32.end [16/16] 0.0, 128
        %v235 = vpop.trf.xlu0
        %v236 = vpop.trf.xlu0
        %v237 = vpop.trf.xlu0
        %v238 = vpop.trf.xlu0
        %v239 = vpop.trf.xlu0
        %v240 = vpop.trf.xlu0
        %v241 = vpop.trf.xlu0
        %v242 = vpop.trf.xlu0
        %v243 = vpop.trf.xlu0
        %v244 = vpop.trf.xlu0
        %v245 = vpop.trf.xlu0
        %v246 = vpop.trf.xlu0
        %v247 = vpop.trf.xlu0
        %v248 = vpop.trf.xlu0
        %v249 = vpop.trf.xlu0
        %v250 = vpop.trf.xlu0
        %v251 = vpack.c.bf16 %v236, %v235
        %v252 = vld [vmem:[#allocation5] sm:$0xf]
        %v253 = vld [vmem:[%s2] sm:$0x1]
        %v255 = vlaneseq
        %v256 = vshrl.u32 %v255, 7
        %v257 = vsub.s32 0, %v256
        %v258 = vrot.slane %v253, %v257
        %vm260 = vcmask 64512
        %v262 = vsel %vm260, %v251, 0
        %vm264 = vcmask 1043456
        %v266 = vsel %vm264, %v252, 0
        %268 = vmatprep.subr.bf16.mxu0 0
        %269 = vmatpush1.bf16.msra.mxu0 %v266
        %270 = vmatprep.subr.bf16.mxu0 0
        %271 = vmatpush1.bf16.msra.mxu0 0
        %272 = vmatprep.subr.bf16.mxu0 0
        %273 = vmatpush1.bf16.msra.mxu0 0
        %274 = vmatprep.subr.bf16.mxu0 0
        %275 = vmatpush1.bf16.msra.mxu0 0
        %276 = vmatprep.subr.bf16.mxu0 0
        %277 = vmatpush1.bf16.msra.mxu0 0
        %278 = vmatprep.subr.bf16.mxu0 0
        %279 = vmatpush1.bf16.msra.mxu0 0
        %280 = vmatprep.subr.bf16.mxu0 0
        %281 = vmatpush1.bf16.msra.mxu0 0
        %282 = vmatprep.subr.bf16.mxu0 0
        %283 = vmatpush1.bf16.msra.mxu0 0
        %284 = vmatprep.subr.bf16.mxu0 0
        %285 = vmatpush1.bf16.msra.mxu0 0
        %286 = vmatprep.subr.bf16.mxu0 0
        %287 = vmatpush1.bf16.msra.mxu0 0
        %288 = vmatprep.subr.bf16.mxu0 0
        %289 = vmatpush1.bf16.msra.mxu0 0
        %290 = vmatprep.subr.bf16.mxu0 0
        %291 = vmatpush1.bf16.msra.mxu0 0
        %292 = vmatprep.subr.bf16.mxu0 0
        %293 = vmatpush1.bf16.msra.mxu0 0
        %294 = vmatprep.subr.bf16.mxu0 0
        %295 = vmatpush1.bf16.msra.mxu0 0
        %296 = vmatprep.subr.bf16.mxu0 0
        %297 = vmatpush1.bf16.msra.mxu0 0
        %298 = vmatprep.subr.bf16.mxu0 0
        %299 = vmatpush1.bf16.msra.mxu0 0
        %300 = vmatprep.mubr.bf16.mxu0 0
        %301 = vmatmul.mubr.bf16.gmra.mrb[0].mxu0 %v262
        %v302 = vpop.f32.mrb[0].mxu0
        %v303 = vadd.f32 %v258, %v302
        %v304 = vpop.f32.mrb[0].mxu0
        %v305 = vpop.f32.mrb[0].mxu0
        %v306 = vadd.f32 %v258, %v305
        %v307 = vpop.f32.mrb[0].mxu0
        %308 = vdwg.mxu0
        %309 = vst [vmem:[%s215] sm:$0xff] %v303
        %310 = vst [vmem:[%s215 + $0x8] sm:$0xff] %v306
        %s311 = sand.u32 %s113, 1
        %s312 = scalar_lea.sflag [#allocation4], %s311
        %s313 = sand.u32 %s113, 1
        %s314 = smul.addr %s313, 16
        %s315 = scalar_lea.vmem [#allocation7], %s314
        // Predicated region
        $region41: #{tpu_custom_call.1} parent=31 // pred_check
          %p316 = pneg %p123
        $region42: #{tpu_custom_call.1} parent=31 // pred_check_branch
          %318 = sbr.rel (%p316) target = $region44
        $region43: #{tpu_custom_call.1} parent=31 // pred_region
          %s319 = smul.u32 2, %s26
          %s321 = ssub.s32 256, 256
          %322 = vsyncadd %s312, %s321
          %s323 = smul.addr %s25, 2
          %s324 = sadd.s32 %s319, %s323
          %s325 = smul.addr %s324, 128
          %s326 = scalar_lea.hbm %s3, %s325
          %s327 = sshll.u32 %s315, 4
          %s328 = int_to_ptr.vmem [resolvable:$true] %s327
          %333 = dma.vmem_to_hbm [thread:$0]  %s328, 256, %s326, %s312, 128, 128, 8
        $region44: #{tpu_custom_call.1} parent=31 // pred_fallthru
          _
      $region32: #{tpu_custom_call.1} parent=5 // pred_fallthru
        _
      %p334 = scmp.le.s32.totalorder 2, %s16
      // Predicated region
      $region45: #{tpu_custom_call.1} parent=5 // pred_check
        %p335 = pneg %p334
      $region46: #{tpu_custom_call.1} parent=5 // pred_check_branch
        %337 = sbr.rel (%p335) target = $region48
      $region47: #{tpu_custom_call.1} parent=5 // pred_region
        %s338 = ssub.s32 %s16, 2
        // Predicated region
        $region49: #{tpu_custom_call.1} parent=47 // pred_check
          %p339 = pneg %p129
        $region50: #{tpu_custom_call.1} parent=47 // pred_check_branch
          %341 = sbr.rel (%p339) target = $region52
        $region51: #{tpu_custom_call.1} parent=47 // pred_region
          %s342 = sand.u32 %s114, 1
          %s343 = scalar_lea.sflag [#allocation4], %s342
          %s344 = sand.u32 %s114, 1
          %s345 = smul.addr %s344, 16
          %s346 = scalar_lea.vmem [#allocation7], %s345
          %347 = dma.done %s343, 256
        $region52: #{tpu_custom_call.1} parent=47 // pred_fallthru
          _
      $region48: #{tpu_custom_call.1} parent=5 // pred_fallthru
        _
    $region6: #{tpu_custom_call.1} parent=1 // loop_footer
      %s20 = sadd.s32 1, %s16
    $region7: #{tpu_custom_call.1} parent=1 // loop_footer_branch
      %15 = sbr.rel target = $region3
    $region8: #{tpu_custom_call.1} parent=1 // loop_exit
      _
    %348 = vsyncpa [#allocation3], 1
    %s349 = scalar_lea.sflag [#allocation3], 1
    %350 = vsyncpa %s349, 1
    %351 = vsyncpa [#allocation6], 1
    %352 = vsyncpa [#allocation4], 1
    %s353 = scalar_lea.sflag [#allocation4], 1
    %354 = vsyncpa %s353, 1

</llo_original>
